<compile_context>
chip_gen: v7x
topology: tpu7x:2x2x1
jax: 0.10.0
libtpu: 0.0.40
codegen_flags: <defaults>
</compile_context>

<pallas_src>
import functools

import jax
import jax.numpy as jnp
from jax import lax
from jax.experimental import pallas as pl
from jax.experimental.pallas import tpu as pltpu


def _round_up(x, m):
    return ((x + m - 1) // m) * m


def _device_kind():
    try:
        return jax.devices()[0].device_kind.lower()
    except Exception:
        return ""


def _vmem_capacity_bytes():
    try:
        return int(pltpu.get_tpu_info().vmem_capacity_bytes)
    except Exception:
        return 64 << 20  # conservative default: v7x TensorCore VMEM


def _choose_tm(M, tm_max=256):
    """Row tile: minimize padding waste, prefer >=2 tiles (v7x megacore), then larger tile."""
    M8 = _round_up(max(M, 1), 8)
    cands = [c for c in (256, 128, 64, 32, 16, 8) if c <= min(M8, tm_max)] or [M8]

    def score(c):
        mp = _round_up(M8, c)
        return (mp - M, 0 if mp // c >= 2 else 1, -c)

    return min(cands, key=score)


def _weight_spec(shape, index_map, multibuffer):
    # Deeper pipeline on streamed weights only in the memory-bound (small tm) regime.
    if multibuffer and hasattr(pl, "Buffered"):
        try:
            return pl.BlockSpec(shape, index_map, pipeline_mode=pl.Buffered(3))
        except TypeError:
            pass
    return pl.BlockSpec(shape, index_map)


def _layernorm_f32(x, g, b, eps):
    x = x.astype(jnp.float32)
    mu = jnp.mean(x, axis=-1, keepdims=True)
    xc = x - mu
    var = jnp.mean(xc * xc, axis=-1, keepdims=True)
    return (xc * lax.rsqrt(var + eps)) * g + b


def _ffn_epilogue(h_f32, b1, w2, bf16_epilogue):
    """bias-add + GELU(tanh) + second matmul partial (f32 accumulation on the MXU)."""
    if bf16_epilogue:
        # bf16 VPU/EUP pass (v6e/v7x): halves vreg traffic, removes the separate cast sweep.
        hb = h_f32.astype(jnp.bfloat16) + b1.astype(jnp.bfloat16)
        hb = jax.nn.gelu(hb, approximate=True)
    else:
        # v5e: no bf16 VPU -> keep the elementwise math in f32, cast only for the MXU.
        hb = jax.nn.gelu(h_f32 + b1, approximate=True).astype(jnp.bfloat16)
    return jnp.dot(hb, w2, preferred_element_type=jnp.float32)


def _resident_kernel(x_ref, g_ref, beta_ref, w1_ref, b1_ref, w2_ref, b2_ref, o_ref,
                     *, eps, bf16_epilogue):
    # Grid: (row_tiles,). Weights are VMEM-resident (constant index_map).
    xn = _layernorm_f32(x_ref[...], g_ref[...], beta_ref[...], eps).astype(w1_ref.dtype)
    h = jnp.dot(xn, w1_ref[...], preferred_element_type=jnp.float32)
    y = _ffn_epilogue(h, b1_ref[...], w2_ref[...], bf16_epilogue) + b2_ref[...]
    # Inner FFN Dropouts and outer PreNormDrop Dropout -> identity (inference).
    o_ref[...] = y.astype(o_ref.dtype)


def _stream_kernel(x_ref, g_ref, beta_ref, w1_ref, b1_ref, w2_ref, b2_ref, o_ref,
                   xn_ref, acc_ref, *, eps, bf16_epilogue):
    # Grid: (row_tiles, hidden_chunks); hidden axis is the reduction (last, "arbitrary").
    k = pl.program_id(1)

    @pl.when(k == 0)
    def _ln():
        xn = _layernorm_f32(x_ref[...], g_ref[...], beta_ref[...], eps)
        xn_ref[...] = xn.astype(xn_ref.dtype)  # bf16 MXU operand, reused across chunks

    h = jnp.dot(xn_ref[...], w1_ref[...], preferred_element_type=jnp.float32)
    part = _ffn_epilogue(h, b1_ref[...], w2_ref[...], bf16_epilogue)

    @pl.when(k == 0)
    def _first():
        # No zero-init + RMW: write the first partial directly, with b2 folded in.
        acc_ref[...] = part + b2_ref[...]

    @pl.when(k > 0)
    def _accum():
        acc_ref[...] += part

    @pl.when(k == pl.num_programs(1) - 1)
    def _finalize():
        o_ref[...] = acc_ref[...].astype(o_ref.dtype)


def pre_norm_drop_ffn(x, gamma, beta, w1, b1, w2, b2, *, eps=1e-5,
                      tk=None, force_stream=False):
    """PreNormDrop with fn=FeedForward (eval mode).

    x: (B, S, dim).  gamma/beta: (dim,) LayerNorm affine.
    Weights stored already transposed: w1 (dim, hidden), w2 (hidden, dim).
    """
    B, S, dim = x.shape
    hidden = w1.shape[1]
    M = B * S
    f32, bf16 = 4, 2

    kind = _device_kind()
    is_v5 = "v5" in kind
    bf16_epilogue = not is_v5  # v5e has no bf16 VPU/EUP

    vmem_cap = _vmem_capacity_bytes()
    vmem_cap_limit = min(int(0.75 * vmem_cap), vmem_cap - (16 << 20))

    tm = _choose_tm(M)
    M_p = _round_up(_round_up(M, 8), tm)

    H_128 = _round_up(hidden, 128)
    weight_bytes = 2 * dim * H_128 * bf16
    resident = (not force_stream) and (weight_bytes <= vmem_cap // 3)

    if resident:
        tk = H_128
        H_p = H_128
    else:
        if tk is None:
            tk = 256 if is_v5 else 512  # smaller f32 h temp on v5e (1 vst slot, no bf16 VPU)
        tk = min(_round_up(tk, 128), H_128)
        H_p = _round_up(H_128, tk)

    x2 = x.reshape(M, dim)
    if M_p != M:
        x2 = jnp.pad(x2, ((0, M_p - M), (0, 0)))  # padded rows sliced off at the end

    # bf16 weights for the MXU (f32 accumulate); hidden zero-padding is exactly neutral
    # (gelu(0 + 0) = 0 and the matching W2 rows are zero).
    w1b = w1.astype(jnp.bfloat16)
    w2b = w2.astype(jnp.bfloat16)
    b1f = b1.astype(jnp.float32)
    if H_p != hidden:
        w1b = jnp.pad(w1b, ((0, 0), (0, H_p - hidden)))
        b1f = jnp.pad(b1f, ((0, H_p - hidden),))
        w2b = jnp.pad(w2b, ((0, H_p - hidden), (0, 0)))

    g2 = gamma.astype(jnp.float32).reshape(1, dim)
    bt2 = beta.astype(jnp.float32).reshape(1, dim)
    b1_2 = b1f.reshape(1, H_p)
    b2_2 = b2.astype(jnp.float32).reshape(1, dim)

    if resident:
        est = (2 * tm * dim * f32 * 2            # x tile + out tile (double-buffered)
               + weight_bytes                    # resident W1 + W2 (single copy)
               + (H_p + 3 * dim) * f32           # biases + LN affine
               + tm * H_p * (f32 + bf16)         # h (f32 MXU output + bf16 pass)
               + tm * dim * f32)                 # live f32 y
        vmem_limit = max(32 << 20, min(int(est * 1.5) + (4 << 20), vmem_cap_limit))

        out = pl.pallas_call(
            functools.partial(_resident_kernel, eps=eps, bf16_epilogue=bf16_epilogue),
            out_shape=jax.ShapeDtypeStruct((M_p, dim), x.dtype),
            grid_spec=pltpu.PrefetchScalarGridSpec(
                num_scalar_prefetch=0,
                grid=(M_p // tm,),
                in_specs=[
                    pl.BlockSpec((tm, dim), lambda i: (i, 0)),   # x rows
                    pl.BlockSpec((1, dim), lambda i: (0, 0)),    # LN gamma
                    pl.BlockSpec((1, dim), lambda i: (0, 0)),    # LN beta
                    pl.BlockSpec((dim, H_p), lambda i: (0, 0)),  # W1 (resident)
                    pl.BlockSpec((1, H_p), lambda i: (0, 0)),    # b1
                    pl.BlockSpec((H_p, dim), lambda i: (0, 0)),  # W2 (resident)
                    pl.BlockSpec((1, dim), lambda i: (0, 0)),    # b2
                ],
                out_specs=pl.BlockSpec((tm, dim), lambda i: (i, 0)),
            ),
            compiler_params=pltpu.CompilerParams(
                dimension_semantics=("parallel",),
                vmem_limit_bytes=vmem_limit,
            ),
        )(x2, g2, bt2, w1b, b1_2, w2b, b2_2)
    else:
        multibuffer = tm < 128  # memory-bound (decode-style) regime
        nbuf = 3 if multibuffer else 2
        est = (2 * tm * dim * f32 * 2                 # x tile + out tile
               + nbuf * 2 * dim * tk * bf16           # streamed W1/W2 chunks
               + nbuf * tk * f32 + 3 * dim * f32 * 2  # b1 chunk + gamma/beta/b2
               + tm * dim * (bf16 + f32)              # xn + acc scratch
               + tm * tk * (f32 + bf16))              # live h intermediate
        vmem_limit = max(32 << 20, min(int(est * 1.5) + (4 << 20), vmem_cap_limit))

        out = pl.pallas_call(
            functools.partial(_stream_kernel, eps=eps, bf16_epilogue=bf16_epilogue),
            out_shape=jax.ShapeDtypeStruct((M_p, dim), x.dtype),
            grid_spec=pltpu.PrefetchScalarGridSpec(
                num_scalar_prefetch=0,
                grid=(M_p // tm, H_p // tk),
                in_specs=[
                    pl.BlockSpec((tm, dim), lambda i, k: (i, 0)),          # x rows
                    pl.BlockSpec((1, dim), lambda i, k: (0, 0)),           # LN gamma
                    pl.BlockSpec((1, dim), lambda i, k: (0, 0)),           # LN beta
                    _weight_spec((dim, tk), lambda i, k: (0, k), multibuffer),  # W1 chunk
                    pl.BlockSpec((1, tk), lambda i, k: (0, k)),            # b1 chunk
                    _weight_spec((tk, dim), lambda i, k: (k, 0), multibuffer),  # W2 chunk
                    pl.BlockSpec((1, dim), lambda i, k: (0, 0)),           # b2
                ],
                out_specs=pl.BlockSpec((tm, dim), lambda i, k: (i, 0)),
                scratch_shapes=[
                    pltpu.VMEM((tm, dim), jnp.bfloat16),  # normalized x (MXU operand)
                    pltpu.VMEM((tm, dim), jnp.float32),   # f32 output accumulator
                ],
            ),
            compiler_params=pltpu.CompilerParams(
                dimension_semantics=("parallel", "arbitrary"),
                vmem_limit_bytes=vmem_limit,
            ),
        )(x2, g2, bt2, w1b, b1_2, w2b, b2_2)

    return out[:M].reshape(B, S, dim)


if __name__ == "__main__":
    # Small shapes consistent with PreNormDrop(dim, dropout_rate, FeedForward(dim, hidden)).
    dim, hidden_dim, dropout_rate = 128, 256, 0.1  # dropout is identity at inference
    B, S = 2, 8
    eps = 1e-5

    key = jax.random.PRNGKey(0)
    kx, kg, kb, kw1, kb1, kw2, kb2 = jax.random.split(key, 7)

    x = jax.random.normal(kx, (B, S, dim), dtype=jnp.float32)
    gamma = 1.0 + 0.1 * jax.random.normal(kg, (dim,), dtype=jnp.float32)
    beta = 0.01 * jax.random.normal(kb, (dim,), dtype=jnp.float32)
    # PyTorch Linear weight is (out, in); stored transposed here.
    w1 = jax.random.normal(kw1, (dim, hidden_dim), dtype=jnp.float32) / jnp.sqrt(dim)
    b1 = 0.01 * jax.random.normal(kb1, (hidden_dim,), dtype=jnp.float32)
    w2 = jax.random.normal(kw2, (hidden_dim, dim), dtype=jnp.float32) / jnp.sqrt(hidden_dim)
    b2 = 0.01 * jax.random.normal(kb2, (dim,), dtype=jnp.float32)

    # Resident-weights path (default for these sizes).
    out = pre_norm_drop_ffn(x, gamma, beta, w1, b1, w2, b2, eps=eps)
    out = jax.block_until_ready(out)

    # Streamed (hidden-chunked) path, forced, to exercise the fallback as well.
    out_s = pre_norm_drop_ffn(x, gamma, beta, w1, b1, w2, b2, eps=eps,
                              force_stream=True, tk=128)
    out_s = jax.block_until_ready(out_s)

    # Pure-JAX f32 reference of PreNormDrop(fn=FeedForward) in eval mode (exact erf GELU).
    mu = jnp.mean(x, axis=-1, keepdims=True)
    var = jnp.mean((x - mu) ** 2, axis=-1, keepdims=True)
    xn = (x - mu) / jnp.sqrt(var + eps) * gamma + beta
    ref = jnp.dot(jax.nn.gelu(jnp.dot(xn, w1) + b1, approximate=False), w2) + b2

    assert out.shape == (B, S, dim)
    assert out_s.shape == (B, S, dim)
    # bf16 MXU operands + bf16 epilogue + tanh-GELU vs a pure-f32 erf reference -> loose tol.
    assert jnp.allclose(out, ref, atol=1e-1, rtol=1e-1), float(jnp.max(jnp.abs(out - ref)))
    assert jnp.allclose(out_s, ref, atol=1e-1, rtol=1e-1), float(jnp.max(jnp.abs(out_s - ref)))

    print("KERNEL_OK")
</pallas_src>

<mosaic_0001>
module attributes {stable_mosaic.version = 11 : i64} {
  func.func @_resident_kernel(%arg0: i32, %arg1: memref<8x128xf32, #tpu.memory_space<vmem>>, %arg2: memref<1x128xf32, #tpu.memory_space<vmem>>, %arg3: memref<1x128xf32, #tpu.memory_space<vmem>>, %arg4: memref<128x256xbf16, #tpu.memory_space<vmem>>, %arg5: memref<1x256xf32, #tpu.memory_space<vmem>>, %arg6: memref<256x128xbf16, #tpu.memory_space<vmem>>, %arg7: memref<1x128xf32, #tpu.memory_space<vmem>>, %arg8: memref<8x128xf32, #tpu.memory_space<vmem>>) attributes {dimension_semantics = [#tpu.dimension_semantics<parallel>], iteration_bounds = array<i64: 2>, scalar_prefetch = 0 : i64, scratch_operands = 0 : i64, tpu.core_type = #tpu.core_type<tc>, window_params = [{transform_indices = @transform_0, window_bounds = array<i64: 8, 128>}, {pipeline_mode = #tpu.pipeline_mode<synchronous>, transform_indices = @transform_1, window_bounds = array<i64: 1, 128>}, {pipeline_mode = #tpu.pipeline_mode<synchronous>, transform_indices = @transform_2, window_bounds = array<i64: 1, 128>}, {pipeline_mode = #tpu.pipeline_mode<synchronous>, transform_indices = @transform_3, window_bounds = array<i64: 128, 256>}, {pipeline_mode = #tpu.pipeline_mode<synchronous>, transform_indices = @transform_4, window_bounds = array<i64: 1, 256>}, {pipeline_mode = #tpu.pipeline_mode<synchronous>, transform_indices = @transform_5, window_bounds = array<i64: 256, 128>}, {pipeline_mode = #tpu.pipeline_mode<synchronous>, transform_indices = @transform_6, window_bounds = array<i64: 1, 128>}, {transform_indices = @transform_7, window_bounds = array<i64: 8, 128>}]} {
    %c0 = arith.constant 0 : index
    %c0_0 = arith.constant 0 : index
    %0 = vector.load %arg1[%c0, %c0_0] : memref<8x128xf32, #tpu.memory_space<vmem>>, vector<8x128xf32>
    %c0_1 = arith.constant 0 : index
    %c0_2 = arith.constant 0 : index
    %1 = vector.load %arg2[%c0_1, %c0_2] : memref<1x128xf32, #tpu.memory_space<vmem>>, vector<1x128xf32>
    %c0_3 = arith.constant 0 : index
    %c0_4 = arith.constant 0 : index
    %2 = vector.load %arg3[%c0_3, %c0_4] : memref<1x128xf32, #tpu.memory_space<vmem>>, vector<1x128xf32>
    %cst = arith.constant dense<0.000000e+00> : vector<8xf32>
    %3 = vector.multi_reduction <add>, %0, %cst [1] : vector<8x128xf32> to vector<8xf32>
    %4 = vector.shape_cast %3 : vector<8xf32> to vector<8x1xf32>
    %cst_5 = arith.constant 1.280000e+02 : f32
    %5 = vector.broadcast %cst_5 : f32 to vector<8x1xf32>
    %6 = arith.divf %4, %5 : vector<8x1xf32>
    %7 = vector.broadcast %6 : vector<8x1xf32> to vector<8x128xf32>
    %8 = arith.subf %0, %7 : vector<8x128xf32>
    %9 = arith.mulf %8, %8 : vector<8x128xf32>
    %cst_6 = arith.constant dense<0.000000e+00> : vector<8xf32>
    %10 = vector.multi_reduction <add>, %9, %cst_6 [1] : vector<8x128xf32> to vector<8xf32>
    %11 = vector.shape_cast %10 : vector<8xf32> to vector<8x1xf32>
    %cst_7 = arith.constant 1.280000e+02 : f32
    %12 = vector.broadcast %cst_7 : f32 to vector<8x1xf32>
    %13 = arith.divf %11, %12 : vector<8x1xf32>
    %cst_8 = arith.constant 9.99999974E-6 : f32
    %14 = vector.broadcast %cst_8 : f32 to vector<8x1xf32>
    %15 = arith.addf %13, %14 : vector<8x1xf32>
    %16 = math.rsqrt %15 : vector<8x1xf32>
    %17 = vector.broadcast %16 : vector<8x1xf32> to vector<8x128xf32>
    %18 = arith.mulf %8, %17 : vector<8x128xf32>
    %19 = vector.broadcast %1 : vector<1x128xf32> to vector<8x128xf32>
    %20 = arith.mulf %18, %19 : vector<8x128xf32>
    %21 = vector.broadcast %2 : vector<1x128xf32> to vector<8x128xf32>
    %22 = arith.addf %20, %21 : vector<8x128xf32>
    %23 = arith.truncf %22 : vector<8x128xf32> to vector<8x128xbf16>
    %c0_9 = arith.constant 0 : index
    %c0_10 = arith.constant 0 : index
    %24 = vector.load %arg4[%c0_9, %c0_10] : memref<128x256xbf16, #tpu.memory_space<vmem>>, vector<128x256xbf16>
    %cst_11 = arith.constant dense<0.000000e+00> : vector<8x256xf32>
    %25 = tpu.matmul %23, %24, %cst_11 {dimension_numbers = #tpu.dot_dimension_numbers<[1], [0], [0], [1], [0, 0, 1, 1], [], []>} : vector<8x128xbf16>, vector<128x256xbf16>, vector<8x256xf32> -> vector<8x256xf32>
    %c0_12 = arith.constant 0 : index
    %c0_13 = arith.constant 0 : index
    %26 = vector.load %arg5[%c0_12, %c0_13] : memref<1x256xf32, #tpu.memory_space<vmem>>, vector<1x256xf32>
    %c0_14 = arith.constant 0 : index
    %c0_15 = arith.constant 0 : index
    %27 = vector.load %arg6[%c0_14, %c0_15] : memref<256x128xbf16, #tpu.memory_space<vmem>>, vector<256x128xbf16>
    %28 = arith.truncf %25 : vector<8x256xf32> to vector<8x256xbf16>
    %29 = arith.truncf %26 : vector<1x256xf32> to vector<1x256xbf16>
    %30 = vector.broadcast %29 : vector<1x256xbf16> to vector<8x256xbf16>
    %31 = arith.addf %28, %30 : vector<8x256xbf16>
    %32 = arith.mulf %31, %31 : vector<8x256xbf16>
    %33 = arith.mulf %31, %32 : vector<8x256xbf16>
    %cst_16 = arith.constant 4.467770e-02 : bf16
    %34 = vector.broadcast %cst_16 : bf16 to vector<8x256xbf16>
    %35 = arith.mulf %34, %33 : vector<8x256xbf16>
    %36 = arith.addf %31, %35 : vector<8x256xbf16>
    %cst_17 = arith.constant 7.968750e-01 : bf16
    %37 = vector.broadcast %cst_17 : bf16 to vector<8x256xbf16>
    %38 = arith.mulf %37, %36 : vector<8x256xbf16>
    %39 = math.tanh %38 : vector<8x256xbf16>
    %cst_18 = arith.constant 1.000000e+00 : bf16
    %40 = vector.broadcast %cst_18 : bf16 to vector<8x256xbf16>
    %41 = arith.addf %40, %39 : vector<8x256xbf16>
    %cst_19 = arith.constant 5.000000e-01 : bf16
    %42 = vector.broadcast %cst_19 : bf16 to vector<8x256xbf16>
    %43 = arith.mulf %42, %41 : vector<8x256xbf16>
    %44 = arith.mulf %31, %43 : vector<8x256xbf16>
    %cst_20 = arith.constant dense<0.000000e+00> : vector<8x128xf32>
    %45 = tpu.matmul %44, %27, %cst_20 {dimension_numbers = #tpu.dot_dimension_numbers<[1], [0], [0], [1], [0, 0, 1, 1], [], []>} : vector<8x256xbf16>, vector<256x128xbf16>, vector<8x128xf32> -> vector<8x128xf32>
    %c0_21 = arith.constant 0 : index
    %c0_22 = arith.constant 0 : index
    %46 = vector.load %arg7[%c0_21, %c0_22] : memref<1x128xf32, #tpu.memory_space<vmem>>, vector<1x128xf32>
    %47 = vector.broadcast %46 : vector<1x128xf32> to vector<8x128xf32>
    %48 = arith.addf %45, %47 : vector<8x128xf32>
    %c0_23 = arith.constant 0 : index
    %c0_24 = arith.constant 0 : index
    %49 = vector.load %arg8[%c0_23, %c0_24] : memref<8x128xf32, #tpu.memory_space<vmem>>, vector<8x128xf32>
    tpu.vector_store %arg8[%c0_23, %c0_24], %48 {strides = array<i32>} : memref<8x128xf32, #tpu.memory_space<vmem>>, vector<8x128xf32>,
    return
  }
  func.func @transform_0(%arg0: i32) -> (i32, i32) {
    %c0_i32 = arith.constant 0 : i32
    %c0_i32_0 = arith.constant 0 : i32
    return %arg0, %c0_i32 : i32, i32
  }
  func.func @transform_1(%arg0: i32) -> (i32, i32) {
    %c0_i32 = arith.constant 0 : i32
    %c0_i32_0 = arith.constant 0 : i32
    %c0_i32_1 = arith.constant 0 : i32
    return %c0_i32, %c0_i32_0 : i32, i32
  }
  func.func @transform_2(%arg0: i32) -> (i32, i32) {
    %c0_i32 = arith.constant 0 : i32
    %c0_i32_0 = arith.constant 0 : i32
    %c0_i32_1 = arith.constant 0 : i32
    return %c0_i32, %c0_i32_0 : i32, i32
  }
  func.func @transform_3(%arg0: i32) -> (i32, i32) {
    %c0_i32 = arith.constant 0 : i32
    %c0_i32_0 = arith.constant 0 : i32
    %c0_i32_1 = arith.constant 0 : i32
    return %c0_i32, %c0_i32_0 : i32, i32
  }
  func.func @transform_4(%arg0: i32) -> (i32, i32) {
    %c0_i32 = arith.constant 0 : i32
    %c0_i32_0 = arith.constant 0 : i32
    %c0_i32_1 = arith.constant 0 : i32
    return %c0_i32, %c0_i32_0 : i32, i32
  }
  func.func @transform_5(%arg0: i32) -> (i32, i32) {
    %c0_i32 = arith.constant 0 : i32
    %c0_i32_0 = arith.constant 0 : i32
    %c0_i32_1 = arith.constant 0 : i32
    return %c0_i32, %c0_i32_0 : i32, i32
  }
  func.func @transform_6(%arg0: i32) -> (i32, i32) {
    %c0_i32 = arith.constant 0 : i32
    %c0_i32_0 = arith.constant 0 : i32
    %c0_i32_1 = arith.constant 0 : i32
    return %c0_i32, %c0_i32_0 : i32, i32
  }
  func.func @transform_7(%arg0: i32) -> (i32, i32) {
    %c0_i32 = arith.constant 0 : i32
    %c0_i32_0 = arith.constant 0 : i32
    return %arg0, %c0_i32 : i32, i32
  }
}

</mosaic_0001>

<llo_original>
// kernel: tpu_custom_call.1
$region0: #{tpu_custom_call.1}
  #allocation0 [shape = 'u32[]', space=smem, size = 0x4, offset = 0x4, fixed_abs, tag = 'smem constant byte address 0x4 - core index']
  #allocation1 [shape = 'u32[144,128]{1,0:T(1,128)}', space=vmem, size = 0x12000, scoped, tag = 'internal scratch']
  %s0 = inlined_call_operand.hbm [shape: f32[16,128], index: 0, kind: input, shape index: {}]
  %s1 = inlined_call_operand.vmem [shape: f32[1,128], index: 1, kind: input, shape index: {}]
  %s2 = inlined_call_operand.vmem [shape: f32[1,128], index: 2, kind: input, shape index: {}]
  %s3 = inlined_call_operand.hbm [shape: bf16[128,256], index: 3, kind: input, shape index: {}]
  %s4 = inlined_call_operand.vmem [shape: f32[1,256], index: 4, kind: input, shape index: {}]
  %s5 = inlined_call_operand.hbm [shape: bf16[256,128], index: 5, kind: input, shape index: {}]
  %s6 = inlined_call_operand.vmem [shape: f32[1,128], index: 6, kind: input, shape index: {}]
  %s7 = inlined_call_operand.hbm [shape: f32[16,128], index: 7, kind: output, shape index: {}]
  %s8 = sld [smem:[#allocation0]]
  $region73: #{tpu_custom_call.1} parent=0
    _
  %s10 = ssub.s32 1, %s8
  %s11 = scalar_select 0, %s10, %s8
  $region1: #{tpu_custom_call.1} parent=0
    #allocation2 [shape = 'u8[8192]{0}', space=vmem, size = 0x2000, scoped, tag = 'input window, operand 0']
    #allocation3 [shape = 's32[2]{0}', space=sflag, size = 0x8, scoped, tag = 'scoped memory for tpu_custom_call.1']
    #allocation4 [shape = 's32[2]{0}', space=sflag, size = 0x8, scoped, tag = 'scoped memory for tpu_custom_call.1']
    #allocation5 [shape = 'u8[65536]{0}', space=vmem, size = 0x10000, scoped, tag = 'input window, operand 3, single buffered']
    #allocation6 [shape = 's32[1]{0}', space=sflag, size = 0x4, scoped, tag = 'scoped memory for tpu_custom_call.1']
    #allocation7 [shape = 'u8[65536]{0}', space=vmem, size = 0x10000, scoped, tag = 'input window, operand 5, single buffered']
    #allocation8 [shape = 'u8[8192]{0}', space=vmem, size = 0x2000, scoped, tag = 'output window, operand 0']
    %12 = vsyncpa [#allocation3], 0
    %s13 = scalar_lea.sflag [#allocation3], 1
    %14 = vsyncpa %s13, 0
    %15 = vsyncpa [#allocation6], 0
    %16 = vsyncpa [#allocation4], 0
    %s17 = scalar_lea.sflag [#allocation4], 1
    %18 = vsyncpa %s17, 0
    loop: start=0, step=1, limit=4
    $region2: #{tpu_custom_call.1} parent=1 // loop_pre_header
      _
    $region3: #{tpu_custom_call.1} parent=1 // loop_header
      %s20 = sphi 0, %s24
      %p21 = scmp.ge.s32.totalorder %s20, 4
      %s30 = sphi 0, %s32
      %s33 = sphi 0, %s30
      %s34 = sphi 0, %s33
      %s50 = sphi 0, %s34
      %s54 = sphi 0, %s54
      %s56 = sphi 0, %s54
      %s57 = sphi 0, %s56
      %s71 = sphi 0, %s57
      %s75 = sphi 0, %s75
      %s77 = sphi 0, %s75
      %s78 = sphi 0, %s77
      %s92 = sphi 0, %s78
      %s96 = sphi 0, %s96
      %s98 = sphi 0, %s96
      %s99 = sphi 0, %s98
      %s113 = sphi 0, %s99
      %s117 = sphi 0, %s117
      %s119 = sphi 0, %s117
      %s120 = sphi 0, %s119
      %s134 = sphi 0, %s120
      %s138 = sphi 0, %s138
      %s140 = sphi 0, %s138
      %s141 = sphi 0, %s140
      %s155 = sphi 0, %s141
      %s159 = sphi 0, %s159
      %s161 = sphi 0, %s159
      %s162 = sphi 0, %s161
      %s176 = sphi 0, %s162
      %s182 = sphi 0, %s184
      %s185 = sphi 0, %s182
      %s186 = sphi 0, %s185
      %s202 = sphi 0, %s186
    $region4: #{tpu_custom_call.1} parent=1 // loop_header_branch
      %23 = sbr.rel (%p21) target = $region8
    $region5: #{tpu_custom_call.1} parent=1 // loop_body
      %s25 = ssub.s32 %s20, 1
      %s26 = ssub.s32 %s20, 2
      %s27 = sadd.s32 %s20, 1
      %s28 = ssub.s32 %s20, %s27
      %p29 = scmp.eq.s32.totalorder %s28, 0
      %s31 = sadd.s32 %s30, 1
      %s32 = scalar_select %p29, %s30, %s31
      %p35 = pneg %p29
      %p36 = scmp.eq.s32.totalorder %s20, 1
      %p37 = por %p35, %p36
      %p38 = scmp.ne.s32.totalorder %s30, %s33
      %p39 = scmp.eq.s32.totalorder %s20, 0
      %p40 = por %p38, %p39
      %p41 = scmp.ne.s32.totalorder %s30, %s33
      %p42 = scmp.eq.s32.totalorder %s25, 1
      %p43 = por %p41, %p42
      %p44 = scmp.ne.s32.totalorder %s33, %s34
      %p45 = scmp.eq.s32.totalorder %s25, 0
      %p46 = por %p44, %p45
      %p47 = scmp.ne.s32.totalorder %s33, %s34
      %p48 = scmp.eq.s32.totalorder %s26, 1
      %p49 = por %p47, %p48
      %p51 = scmp.ne.s32.totalorder %s34, %s50
      %p52 = scmp.eq.s32.totalorder %s26, 0
      %p53 = por %p51, %p52
      %s55 = sadd.s32 %s54, 1
      %p58 = scmp.eq.s32.totalorder %s20, 1
      %p59 = scmp.ne.s32.totalorder %s54, %s56
      %p60 = scmp.eq.s32.totalorder %s20, 0
      %p61 = por %p59, %p60
      %p62 = scmp.ne.s32.totalorder %s54, %s56
      %p63 = scmp.eq.s32.totalorder %s25, 1
      %p64 = por %p62, %p63
      %p65 = scmp.ne.s32.totalorder %s56, %s57
      %p66 = scmp.eq.s32.totalorder %s25, 0
      %p67 = por %p65, %p66
      %p68 = scmp.ne.s32.totalorder %s56, %s57
      %p69 = scmp.eq.s32.totalorder %s26, 1
      %p70 = por %p68, %p69
      %p72 = scmp.ne.s32.totalorder %s57, %s71
      %p73 = scmp.eq.s32.totalorder %s26, 0
      %p74 = por %p72, %p73
      %s76 = sadd.s32 %s75, 1
      %p79 = scmp.eq.s32.totalorder %s20, 1
      %p80 = scmp.ne.s32.totalorder %s75, %s77
      %p81 = scmp.eq.s32.totalorder %s20, 0
      %p82 = por %p80, %p81
      %p83 = scmp.ne.s32.totalorder %s75, %s77
      %p84 = scmp.eq.s32.totalorder %s25, 1
      %p85 = por %p83, %p84
      %p86 = scmp.ne.s32.totalorder %s77, %s78
      %p87 = scmp.eq.s32.totalorder %s25, 0
      %p88 = por %p86, %p87
      %p89 = scmp.ne.s32.totalorder %s77, %s78
      %p90 = scmp.eq.s32.totalorder %s26, 1
      %p91 = por %p89, %p90
      %p93 = scmp.ne.s32.totalorder %s78, %s92
      %p94 = scmp.eq.s32.totalorder %s26, 0
      %p95 = por %p93, %p94
      %s97 = sadd.s32 %s96, 1
      %p100 = scmp.eq.s32.totalorder %s20, 1
      %p101 = scmp.ne.s32.totalorder %s96, %s98
      %p102 = scmp.eq.s32.totalorder %s20, 0
      %p103 = por %p101, %p102
      %p104 = scmp.ne.s32.totalorder %s96, %s98
      %p105 = scmp.eq.s32.totalorder %s25, 1
      %p106 = por %p104, %p105
      %p107 = scmp.ne.s32.totalorder %s98, %s99
      %p108 = scmp.eq.s32.totalorder %s25, 0
      %p109 = por %p107, %p108
      %p110 = scmp.ne.s32.totalorder %s98, %s99
      %p111 = scmp.eq.s32.totalorder %s26, 1
      %p112 = por %p110, %p111
      %p114 = scmp.ne.s32.totalorder %s99, %s113
      %p115 = scmp.eq.s32.totalorder %s26, 0
      %p116 = por %p114, %p115
      %s118 = sadd.s32 %s117, 1
      %p121 = scmp.eq.s32.totalorder %s20, 1
      %p122 = scmp.ne.s32.totalorder %s117, %s119
      %p123 = scmp.eq.s32.totalorder %s20, 0
      %p124 = por %p122, %p123
      %p125 = scmp.ne.s32.totalorder %s117, %s119
      %p126 = scmp.eq.s32.totalorder %s25, 1
      %p127 = por %p125, %p126
      %p128 = scmp.ne.s32.totalorder %s119, %s120
      %p129 = scmp.eq.s32.totalorder %s25, 0
      %p130 = por %p128, %p129
      %p131 = scmp.ne.s32.totalorder %s119, %s120
      %p132 = scmp.eq.s32.totalorder %s26, 1
      %p133 = por %p131, %p132
      %p135 = scmp.ne.s32.totalorder %s120, %s134
      %p136 = scmp.eq.s32.totalorder %s26, 0
      %p137 = por %p135, %p136
      %s139 = sadd.s32 %s138, 1
      %p142 = scmp.eq.s32.totalorder %s20, 1
      %p143 = scmp.ne.s32.totalorder %s138, %s140
      %p144 = scmp.eq.s32.totalorder %s20, 0
      %p145 = por %p143, %p144
      %p146 = scmp.ne.s32.totalorder %s138, %s140
      %p147 = scmp.eq.s32.totalorder %s25, 1
      %p148 = por %p146, %p147
      %p149 = scmp.ne.s32.totalorder %s140, %s141
      %p150 = scmp.eq.s32.totalorder %s25, 0
      %p151 = por %p149, %p150
      %p152 = scmp.ne.s32.totalorder %s140, %s141
      %p153 = scmp.eq.s32.totalorder %s26, 1
      %p154 = por %p152, %p153
      %p156 = scmp.ne.s32.totalorder %s141, %s155
      %p157 = scmp.eq.s32.totalorder %s26, 0
      %p158 = por %p156, %p157
      %s160 = sadd.s32 %s159, 1
      %p163 = scmp.eq.s32.totalorder %s20, 1
      %p164 = scmp.ne.s32.totalorder %s159, %s161
      %p165 = scmp.eq.s32.totalorder %s20, 0
      %p166 = por %p164, %p165
      %p167 = scmp.ne.s32.totalorder %s159, %s161
      %p168 = scmp.eq.s32.totalorder %s25, 1
      %p169 = por %p167, %p168
      %p170 = scmp.ne.s32.totalorder %s161, %s162
      %p171 = scmp.eq.s32.totalorder %s25, 0
      %p172 = por %p170, %p171
      %p173 = scmp.ne.s32.totalorder %s161, %s162
      %p174 = scmp.eq.s32.totalorder %s26, 1
      %p175 = por %p173, %p174
      %p177 = scmp.ne.s32.totalorder %s162, %s176
      %p178 = scmp.eq.s32.totalorder %s26, 0
      %p179 = por %p177, %p178
      %s180 = ssub.s32 %s20, %s27
      %p181 = scmp.eq.s32.totalorder %s180, 0
      %s183 = sadd.s32 %s182, 1
      %s184 = scalar_select %p181, %s182, %s183
      %p187 = pneg %p181
      %p188 = scmp.eq.s32.totalorder %s20, 1
      %p189 = por %p187, %p188
      %p190 = scmp.ne.s32.totalorder %s182, %s185
      %p191 = scmp.eq.s32.totalorder %s20, 0
      %p192 = por %p190, %p191
      %p193 = scmp.ne.s32.totalorder %s182, %s185
      %p194 = scmp.eq.s32.totalorder %s25, 1
      %p195 = por %p193, %p194
      %p196 = scmp.ne.s32.totalorder %s185, %s186
      %p197 = scmp.eq.s32.totalorder %s25, 0
      %p198 = por %p196, %p197
      %p199 = scmp.ne.s32.totalorder %s185, %s186
      %p200 = scmp.eq.s32.totalorder %s26, 1
      %p201 = por %p199, %p200
      %p203 = scmp.ne.s32.totalorder %s186, %s202
      %p204 = scmp.eq.s32.totalorder %s26, 0
      %p205 = por %p203, %p204
      %p206 = scmp.le.s32.totalorder 1, %s20
      %p207 = scmp.lt.s32.totalorder %s20, 3
      %p208 = pnand %p206, %p207
      %p209 = pneg %p208
      // Predicated region
      $region9: #{tpu_custom_call.1} parent=5 // pred_check
        _
      $region10: #{tpu_custom_call.1} parent=5 // pred_check_branch
        %211 = sbr.rel (%p208) target = $region12
      $region11: #{tpu_custom_call.1} parent=5 // pred_region
        %s212 = ssub.s32 %s20, 1
        // Predicated region
        $region13: #{tpu_custom_call.1} parent=11 // pred_check
          %p213 = pneg %p67
        $region14: #{tpu_custom_call.1} parent=11 // pred_check_branch
          %215 = sbr.rel (%p213) target = $region16
        $region15: #{tpu_custom_call.1} parent=11 // pred_region
          _
        $region16: #{tpu_custom_call.1} parent=11 // pred_fallthru
          _
        // Predicated region
        $region17: #{tpu_custom_call.1} parent=11 // pred_check
          %p216 = pneg %p88
        $region18: #{tpu_custom_call.1} parent=11 // pred_check_branch
          %218 = sbr.rel (%p216) target = $region20
        $region19: #{tpu_custom_call.1} parent=11 // pred_region
          _
        $region20: #{tpu_custom_call.1} parent=11 // pred_fallthru
          _
        // Predicated region
        $region21: #{tpu_custom_call.1} parent=11 // pred_check
          %p219 = pneg %p109
        $region22: #{tpu_custom_call.1} parent=11 // pred_check_branch
          %221 = sbr.rel (%p219) target = $region24
        $region23: #{tpu_custom_call.1} parent=11 // pred_region
          %s223 = ssub.s32 2048, 2048
          %224 = vsyncadd [#allocation6], %s223
          %s225 = sshll.u32 [#allocation5], 4
          %s226 = int_to_ptr.vmem [resolvable:$true] %s225
          %231 = dma.hbm_to_vmem [thread:$0]  %s3, 2048, %s226, [#allocation6], 128, 128, 8
        $region24: #{tpu_custom_call.1} parent=11 // pred_fallthru
          _
        // Predicated region
        $region25: #{tpu_custom_call.1} parent=11 // pred_check
          %p232 = pneg %p130
        $region26: #{tpu_custom_call.1} parent=11 // pred_check_branch
          %234 = sbr.rel (%p232) target = $region28
        $region27: #{tpu_custom_call.1} parent=11 // pred_region
          _
        $region28: #{tpu_custom_call.1} parent=11 // pred_fallthru
          _
        // Predicated region
        $region29: #{tpu_custom_call.1} parent=11 // pred_check
          %p235 = pneg %p151
        $region30: #{tpu_custom_call.1} parent=11 // pred_check_branch
          %237 = sbr.rel (%p235) target = $region32
        $region31: #{tpu_custom_call.1} parent=11 // pred_region
          %s239 = ssub.s32 2048, 2048
          %240 = vsyncadd [#allocation6], %s239
          %s241 = sshll.u32 [#allocation7], 4
          %s242 = int_to_ptr.vmem [resolvable:$true] %s241
          %247 = dma.hbm_to_vmem [thread:$0]  %s5, 2048, %s242, [#allocation6], 64, 64, 4
        $region32: #{tpu_custom_call.1} parent=11 // pred_fallthru
          _
        // Predicated region
        $region33: #{tpu_custom_call.1} parent=11 // pred_check
          %p248 = pneg %p172
        $region34: #{tpu_custom_call.1} parent=11 // pred_check_branch
          %250 = sbr.rel (%p248) target = $region36
        $region35: #{tpu_custom_call.1} parent=11 // pred_region
          _
        $region36: #{tpu_custom_call.1} parent=11 // pred_fallthru
          _
      $region12: #{tpu_custom_call.1} parent=5 // pred_fallthru
        _
      %p251 = scmp.lt.s32.totalorder %s20, 2
      // Predicated region
      $region37: #{tpu_custom_call.1} parent=5 // pred_check
        %p252 = pneg %p251
      $region38: #{tpu_custom_call.1} parent=5 // pred_check_branch
        %254 = sbr.rel (%p252) target = $region40
      $region39: #{tpu_custom_call.1} parent=5 // pred_region
        // Predicated region
        $region41: #{tpu_custom_call.1} parent=39 // pred_check
          %p255 = pneg %p40
        $region42: #{tpu_custom_call.1} parent=39 // pred_check_branch
          %257 = sbr.rel (%p255) target = $region44
        $region43: #{tpu_custom_call.1} parent=39 // pred_region
          %s258 = sand.u32 %s30, 1
          %s259 = scalar_lea.sflag [#allocation3], %s258
          %s260 = sand.u32 %s30, 1
          %s261 = smul.addr %s260, 8
          %s262 = scalar_lea.vmem [#allocation2], %s261
          %s264 = ssub.s32 128, 128
          %265 = vsyncadd %s259, %s264
          %s266 = smul.addr %s20, 128
          %s267 = scalar_lea.hbm %s0, %s266
          %s269 = sshll.u32 %s262, 4
          %s270 = int_to_ptr.vmem [resolvable:$true] %s269
          %272 = dma.hbm_to_vmem [thread:$0]  %s267, 128, %s270, %s259
        $region44: #{tpu_custom_call.1} parent=39 // pred_fallthru
          _
      $region40: #{tpu_custom_call.1} parent=5 // pred_fallthru
        _
      %p273 = scmp.le.s32.totalorder 1, %s20
      %p274 = scmp.lt.s32.totalorder %s20, 3
      %p275 = pnand %p273, %p274
      %p276 = pneg %p275
      // Predicated region
      $region45: #{tpu_custom_call.1} parent=5 // pred_check
        _
      $region46: #{tpu_custom_call.1} parent=5 // pred_check_branch
        %278 = sbr.rel (%p275) target = $region48
      $region47: #{tpu_custom_call.1} parent=5 // pred_region
        %s279 = ssub.s32 %s20, 1
        %s280 = sand.u32 %s33, 1
        %s281 = scalar_lea.sflag [#allocation3], %s280
        %s282 = sand.u32 %s33, 1
        %s283 = smul.addr %s282, 8
        %s284 = scalar_lea.vmem [#allocation2], %s283
        // Predicated region
        $region49: #{tpu_custom_call.1} parent=47 // pred_check
          %p285 = pneg %p46
        $region50: #{tpu_custom_call.1} parent=47 // pred_check_branch
          %287 = sbr.rel (%p285) target = $region52
        $region51: #{tpu_custom_call.1} parent=47 // pred_region
          %288 = dma.done %s281, 128
        $region52: #{tpu_custom_call.1} parent=47 // pred_fallthru
          _
        // Predicated region
        $region53: #{tpu_custom_call.1} parent=47 // pred_check
          %p289 = pneg %p109
        $region54: #{tpu_custom_call.1} parent=47 // pred_check_branch
          %291 = sbr.rel (%p289) target = $region56
        $region55: #{tpu_custom_call.1} parent=47 // pred_region
          %292 = dma.done [#allocation6], 2048
        $region56: #{tpu_custom_call.1} parent=47 // pred_fallthru
          _
        // Predicated region
        $region57: #{tpu_custom_call.1} parent=47 // pred_check
          %p293 = pneg %p151
        $region58: #{tpu_custom_call.1} parent=47 // pred_check_branch
          %295 = sbr.rel (%p293) target = $region60
        $region59: #{tpu_custom_call.1} parent=47 // pred_region
          %296 = dma.done [#allocation6], 2048
        $region60: #{tpu_custom_call.1} parent=47 // pred_fallthru
          _
        %s297 = sand.u32 %s33, 1
        %s298 = scalar_lea.sflag [#allocation3], %s297
        %s299 = sand.u32 %s33, 1
        %s300 = smul.addr %s299, 8
        %s301 = scalar_lea.vmem [#allocation2], %s300
        %p302 = pneg %p46
        %p303 = pneg %p43
        %p304 = pneg %p67
        %p305 = pneg %p64
        %p306 = pneg %p88
        %p307 = pneg %p85
        %p308 = pneg %p109
        %p309 = pneg %p106
        %p310 = pneg %p130
        %p311 = pneg %p127
        %p312 = pneg %p151
        %p313 = pneg %p148
        %p314 = pneg %p172
        %p315 = pneg %p169
        %p316 = pneg %p198
        %p317 = pneg %p195
        %s318 = sand.u32 %s185, 1
        %s319 = scalar_lea.sflag [#allocation4], %s318
        %s320 = sand.u32 %s185, 1
        %s321 = smul.addr %s320, 8
        %s322 = scalar_lea.vmem [#allocation8], %s321
        %v328 = vld [vmem:[%s284] sm:$0xff]
        %v329 = vld [vmem:[%s1] sm:$0x1]
        %v330 = vld [vmem:[%s2] sm:$0x1]
        %331 = vadd.xlane.f32.xlu0 %v328
        %v332 = vpop.xlane.xlu0 %331
        %v333 = vrcp.pop 128.0
        %v334 = vmul.f32 %v332, %v333
        %v335 = vsub.f32 %v328, %v334
        %v336 = vmul.f32 %v335, %v335
        %337 = vadd.xlane.f32.xlu0 %v336
        %v338 = vpop.xlane.xlu0 %337
        %v339 = vmul.f32 %v338, %v333
        %v340 = vadd.f32 %v339, 1e-05
        %v341 = vrsqrt.pop %v340
        %v342 = vmul.f32 %v335, %v341
        %v344 = vlaneseq
        %v345 = vshrl.u32 %v344, 7
        %v346 = vsub.s32 0, %v345
        %v347 = vrot.slane %v329, %v346
        %v349 = vmul.f32 %v342, %v347
        %v351 = vlaneseq
        %v352 = vshrl.u32 %v351, 7
        %v353 = vsub.s32 0, %v352
        %v354 = vrot.slane %v330, %v353
        %v356 = vadd.f32 %v349, %v354
        %v357 = vpack.c.bf16 %v356, %v356
        %v358 = vld [vmem:[#allocation5] sm:$0xff]
        %v359 = vld [vmem:[#allocation5 + $0x8] sm:$0xff]
        %v360 = vld [vmem:[#allocation5 + $0x10] sm:$0xff]
        %v361 = vld [vmem:[#allocation5 + $0x18] sm:$0xff]
        %v362 = vld [vmem:[#allocation5 + $0x20] sm:$0xff]
        %v363 = vld [vmem:[#allocation5 + $0x28] sm:$0xff]
        %v364 = vld [vmem:[#allocation5 + $0x30] sm:$0xff]
        %v365 = vld [vmem:[#allocation5 + $0x38] sm:$0xff]
        %v366 = vld [vmem:[#allocation5 + $0x40] sm:$0xff]
        %v367 = vld [vmem:[#allocation5 + $0x48] sm:$0xff]
        %v368 = vld [vmem:[#allocation5 + $0x50] sm:$0xff]
        %v369 = vld [vmem:[#allocation5 + $0x58] sm:$0xff]
        %v370 = vld [vmem:[#allocation5 + $0x60] sm:$0xff]
        %v371 = vld [vmem:[#allocation5 + $0x68] sm:$0xff]
        %v372 = vld [vmem:[#allocation5 + $0x70] sm:$0xff]
        %v373 = vld [vmem:[#allocation5 + $0x78] sm:$0xff]
        %v390 = vunpack.c.l.b16 %v358
        %v391 = vunpack.c.h.b16 %v358
        %v392 = vunpack.c.l.b16 %v359
        %v393 = vunpack.c.h.b16 %v359
        %v394 = vunpack.c.l.b16 %v360
        %v395 = vunpack.c.h.b16 %v360
        %v396 = vunpack.c.l.b16 %v361
        %v397 = vunpack.c.h.b16 %v361
        %v398 = vunpack.c.l.b16 %v362
        %v399 = vunpack.c.h.b16 %v362
        %v400 = vunpack.c.l.b16 %v363
        %v401 = vunpack.c.h.b16 %v363
        %v402 = vunpack.c.l.b16 %v364
        %v403 = vunpack.c.h.b16 %v364
        %v404 = vunpack.c.l.b16 %v365
        %v405 = vunpack.c.h.b16 %v365
        %v406 = vunpack.c.l.b16 %v366
        %v407 = vunpack.c.h.b16 %v366
        %v408 = vunpack.c.l.b16 %v367
        %v409 = vunpack.c.h.b16 %v367
        %v410 = vunpack.c.l.b16 %v368
        %v411 = vunpack.c.h.b16 %v368
        %v412 = vunpack.c.l.b16 %v369
        %v413 = vunpack.c.h.b16 %v369
        %v414 = vunpack.c.l.b16 %v370
        %v415 = vunpack.c.h.b16 %v370
        %v416 = vunpack.c.l.b16 %v371
        %v417 = vunpack.c.h.b16 %v371
        %v418 = vunpack.c.l.b16 %v372
        %v419 = vunpack.c.h.b16 %v372
        %v420 = vunpack.c.l.b16 %v373
        %v421 = vunpack.c.h.b16 %v373
        %v422 = vpack.c.b16 %v392, %v390
        %v423 = vpack.c.b16 %v393, %v391
        %v424 = vpack.c.b16 %v396, %v394
        %v425 = vpack.c.b16 %v397, %v395
        %v426 = vpack.c.b16 %v400, %v398
        %v427 = vpack.c.b16 %v401, %v399
        %v428 = vpack.c.b16 %v404, %v402
        %v429 = vpack.c.b16 %v405, %v403
        %v430 = vpack.c.b16 %v408, %v406
        %v431 = vpack.c.b16 %v409, %v407
        %v432 = vpack.c.b16 %v412, %v410
        %v433 = vpack.c.b16 %v413, %v411
        %v434 = vpack.c.b16 %v416, %v414
        %v435 = vpack.c.b16 %v417, %v415
        %v436 = vpack.c.b16 %v420, %v418
        %v437 = vpack.c.b16 %v421, %v419
        %454 = vmatprep.subr.bf16.mxu0 %v423
        %455 = vmatpush1.bf16.msra.mxu0 %v422
        %456 = vmatprep.subr.bf16.mxu0 %v425
        %457 = vmatpush1.bf16.msra.mxu0 %v424
        %458 = vmatprep.subr.bf16.mxu0 %v427
        %459 = vmatpush1.bf16.msra.mxu0 %v426
        %460 = vmatprep.subr.bf16.mxu0 %v429
        %461 = vmatpush1.bf16.msra.mxu0 %v428
        %462 = vmatprep.subr.bf16.mxu0 %v431
        %463 = vmatpush1.bf16.msra.mxu0 %v430
        %464 = vmatprep.subr.bf16.mxu0 %v433
        %465 = vmatpush1.bf16.msra.mxu0 %v432
        %466 = vmatprep.subr.bf16.mxu0 %v435
        %467 = vmatpush1.bf16.msra.mxu0 %v434
        %468 = vmatprep.subr.bf16.mxu0 %v437
        %469 = vmatpush1.bf16.msra.mxu0 %v436
        %470 = vmatprep.subr.bf16.mxu0 0
        %471 = vmatpush1.bf16.msra.mxu0 0
        %472 = vmatprep.subr.bf16.mxu0 0
        %473 = vmatpush1.bf16.msra.mxu0 0
        %474 = vmatprep.subr.bf16.mxu0 0
        %475 = vmatpush1.bf16.msra.mxu0 0
        %476 = vmatprep.subr.bf16.mxu0 0
        %477 = vmatpush1.bf16.msra.mxu0 0
        %478 = vmatprep.subr.bf16.mxu0 0
        %479 = vmatpush1.bf16.msra.mxu0 0
        %480 = vmatprep.subr.bf16.mxu0 0
        %481 = vmatpush1.bf16.msra.mxu0 0
        %482 = vmatprep.subr.bf16.mxu0 0
        %483 = vmatpush1.bf16.msra.mxu0 0
        %484 = vmatprep.subr.bf16.mxu0 0
        %485 = vmatpush1.bf16.msra.mxu0 0
        %486 = vmatprep.mubr.bf16.mxu0 0
        %487 = vmatmul.mubr.bf16.gmra.mrb[0].mxu0 %v357
        %v488 = vpop.f32.mrb[0].mxu0
        %v489 = vadd.f32 0.0, %v488
        %v490 = vpop.f32.mrb[0].mxu0
        %v491 = vadd.f32 0.0, %v490
        %v492 = vpop.f32.mrb[0].mxu0
        %v493 = vpop.f32.mrb[0].mxu0
        %494 = vdwg.mxu0
        %v495 = vld [vmem:[%s4] sm:$0x3]
        %v496 = vld [vmem:[#allocation7] sm:$0xf]
        %v497 = vld [vmem:[#allocation7 + $0x4] sm:$0xf]
        %v498 = vld [vmem:[#allocation7 + $0x8] sm:$0xf]
        %v499 = vld [vmem:[#allocation7 + $0xc] sm:$0xf]
        %v500 = vld [vmem:[#allocation7 + $0x10] sm:$0xf]
        %v501 = vld [vmem:[#allocation7 + $0x14] sm:$0xf]
        %v502 = vld [vmem:[#allocation7 + $0x18] sm:$0xf]
        %v503 = vld [vmem:[#allocation7 + $0x1c] sm:$0xf]
        %v504 = vld [vmem:[#allocation7 + $0x20] sm:$0xf]
        %v505 = vld [vmem:[#allocation7 + $0x24] sm:$0xf]
        %v506 = vld [vmem:[#allocation7 + $0x28] sm:$0xf]
        %v507 = vld [vmem:[#allocation7 + $0x2c] sm:$0xf]
        %v508 = vld [vmem:[#allocation7 + $0x30] sm:$0xf]
        %v509 = vld [vmem:[#allocation7 + $0x34] sm:$0xf]
        %v510 = vld [vmem:[#allocation7 + $0x38] sm:$0xf]
        %v511 = vld [vmem:[#allocation7 + $0x3c] sm:$0xf]
        %v512 = vld [vmem:[#allocation7 + $0x40] sm:$0xf]
        %v513 = vld [vmem:[#allocation7 + $0x44] sm:$0xf]
        %v514 = vld [vmem:[#allocation7 + $0x48] sm:$0xf]
        %v515 = vld [vmem:[#allocation7 + $0x4c] sm:$0xf]
        %v516 = vld [vmem:[#allocation7 + $0x50] sm:$0xf]
        %v517 = vld [vmem:[#allocation7 + $0x54] sm:$0xf]
        %v518 = vld [vmem:[#allocation7 + $0x58] sm:$0xf]
        %v519 = vld [vmem:[#allocation7 + $0x5c] sm:$0xf]
        %v520 = vld [vmem:[#allocation7 + $0x60] sm:$0xf]
        %v521 = vld [vmem:[#allocation7 + $0x64] sm:$0xf]
        %v522 = vld [vmem:[#allocation7 + $0x68] sm:$0xf]
        %v523 = vld [vmem:[#allocation7 + $0x6c] sm:$0xf]
        %v524 = vld [vmem:[#allocation7 + $0x70] sm:$0xf]
        %v525 = vld [vmem:[#allocation7 + $0x74] sm:$0xf]
        %v526 = vld [vmem:[#allocation7 + $0x78] sm:$0xf]
        %v527 = vld [vmem:[#allocation7 + $0x7c] sm:$0xf]
        %v528 = vpack.c.bf16 %v489, %v489
        %v529 = vpack.c.bf16 %v491, %v491
        %v531 = vlaneseq
        %v532 = vshrl.u32 %v531, 7
        %v533 = vsub.s32 0, %v532
        %v534 = vrot.slane %v495, %v533
        %v535 = vlaneseq
        %v536 = vshrl.u32 %v535, 7
        %v537 = vsub.s32 1, %v536
        %v538 = vrot.slane %v495, %v537
        %v541 = vpack.c.bf16 %v534, %v534
        %v542 = vpack.c.bf16 %v538, %v538
        %v544 = vpack.i.b16 %v541, %v541
        %v546 = vlaneseq
        %v547 = vshrl.u32 %v546, 7
        %v548 = vsub.s32 0, %v547
        %v549 = vrot.slane %v544, %v548
        %v551 = vpack.i.b16 %v542, %v542
        %v553 = vlaneseq
        %v554 = vshrl.u32 %v553, 7
        %v555 = vsub.s32 0, %v554
        %v556 = vrot.slane %v551, %v555
        %v557 = vadd.bf16 %v528, %v549
        %v558 = vadd.bf16 %v529, %v556
        %v559 = vmul.bf16 %v557, %v557
        %v560 = vmul.bf16 %v558, %v558
        %v561 = vmul.bf16 %v557, %v559
        %v562 = vmul.bf16 %v558, %v560
        %v563 = vmul.bf16 %v561, 1027030327
        %v564 = vmul.bf16 %v562, 1027030327
        %v565 = vadd.bf16 %v557, %v563
        %v566 = vadd.bf16 %v558, %v564
        %v567 = vmul.bf16 %v565, 1061961548
        %v568 = vmul.bf16 %v566, 1061961548
        %v569 = vtanh.bf16.pop %v567
        %v570 = vtanh.bf16.pop %v568
        %v571 = vadd.bf16 %v569, 1065369472
        %v572 = vadd.bf16 %v570, 1065369472
        %v573 = vmul.bf16 %v571, 1056980736
        %v574 = vmul.bf16 %v572, 1056980736
        %v575 = vmul.bf16 %v557, %v573
        %v576 = vmul.bf16 %v558, %v574
        %v577 = vld [vmem:[%s6] sm:$0x1]
        %v579 = vlaneseq
        %v580 = vshrl.u32 %v579, 7
        %v581 = vsub.s32 0, %v580
        %v582 = vrot.slane %v577, %v581
        %v616 = vunpack.c.l.b16 %v496
        %v617 = vunpack.c.l.b16 %v497
        %v618 = vunpack.c.l.b16 %v498
        %v619 = vunpack.c.l.b16 %v499
        %v620 = vunpack.c.l.b16 %v500
        %v621 = vunpack.c.l.b16 %v501
        %v622 = vunpack.c.l.b16 %v502
        %v623 = vunpack.c.l.b16 %v503
        %v624 = vunpack.c.l.b16 %v504
        %v625 = vunpack.c.l.b16 %v505
        %v626 = vunpack.c.l.b16 %v506
        %v627 = vunpack.c.l.b16 %v507
        %v628 = vunpack.c.l.b16 %v508
        %v629 = vunpack.c.l.b16 %v509
        %v630 = vunpack.c.l.b16 %v510
        %v631 = vunpack.c.l.b16 %v511
        %v632 = vunpack.c.l.b16 %v512
        %v633 = vunpack.c.l.b16 %v513
        %v634 = vunpack.c.l.b16 %v514
        %v635 = vunpack.c.l.b16 %v515
        %v636 = vunpack.c.l.b16 %v516
        %v637 = vunpack.c.l.b16 %v517
        %v638 = vunpack.c.l.b16 %v518
        %v639 = vunpack.c.l.b16 %v519
        %v640 = vunpack.c.l.b16 %v520
        %v641 = vunpack.c.l.b16 %v521
        %v642 = vunpack.c.l.b16 %v522
        %v643 = vunpack.c.l.b16 %v523
        %v644 = vunpack.c.l.b16 %v524
        %v645 = vunpack.c.l.b16 %v525
        %v646 = vunpack.c.l.b16 %v526
        %v647 = vunpack.c.l.b16 %v527
        %v648 = vpack.c.b16 %v617, %v616
        %v649 = vpack.c.b16 %v619, %v618
        %v650 = vpack.c.b16 %v621, %v620
        %v651 = vpack.c.b16 %v623, %v622
        %v652 = vpack.c.b16 %v625, %v624
        %v653 = vpack.c.b16 %v627, %v626
        %v654 = vpack.c.b16 %v629, %v628
        %v655 = vpack.c.b16 %v631, %v630
        %v656 = vpack.c.b16 %v633, %v632
        %v657 = vpack.c.b16 %v635, %v634
        %v658 = vpack.c.b16 %v637, %v636
        %v659 = vpack.c.b16 %v639, %v638
        %v660 = vpack.c.b16 %v641, %v640
        %v661 = vpack.c.b16 %v643, %v642
        %v662 = vpack.c.b16 %v645, %v644
        %v663 = vpack.c.b16 %v647, %v646
        %680 = vmatprep.subr.bf16.mxu0 0
        %681 = vmatpush1.bf16.msra.mxu0 %v648
        %682 = vmatprep.subr.bf16.mxu0 0
        %683 = vmatpush1.bf16.msra.mxu0 %v649
        %684 = vmatprep.subr.bf16.mxu0 0
        %685 = vmatpush1.bf16.msra.mxu0 %v650
        %686 = vmatprep.subr.bf16.mxu0 0
        %687 = vmatpush1.bf16.msra.mxu0 %v651
        %688 = vmatprep.subr.bf16.mxu0 0
        %689 = vmatpush1.bf16.msra.mxu0 %v652
        %690 = vmatprep.subr.bf16.mxu0 0
        %691 = vmatpush1.bf16.msra.mxu0 %v653
        %692 = vmatprep.subr.bf16.mxu0 0
        %693 = vmatpush1.bf16.msra.mxu0 %v654
        %694 = vmatprep.subr.bf16.mxu0 0
        %695 = vmatpush1.bf16.msra.mxu0 %v655
        %696 = vmatprep.subr.bf16.mxu0 0
        %697 = vmatpush1.bf16.msra.mxu0 %v656
        %698 = vmatprep.subr.bf16.mxu0 0
        %699 = vmatpush1.bf16.msra.mxu0 %v657
        %700 = vmatprep.subr.bf16.mxu0 0
        %701 = vmatpush1.bf16.msra.mxu0 %v658
        %702 = vmatprep.subr.bf16.mxu0 0
        %703 = vmatpush1.bf16.msra.mxu0 %v659
        %704 = vmatprep.subr.bf16.mxu0 0
        %705 = vmatpush1.bf16.msra.mxu0 %v660
        %706 = vmatprep.subr.bf16.mxu0 0
        %707 = vmatpush1.bf16.msra.mxu0 %v661
        %708 = vmatprep.subr.bf16.mxu0 0
        %709 = vmatpush1.bf16.msra.mxu0 %v662
        %710 = vmatprep.subr.bf16.mxu0 0
        %711 = vmatpush1.bf16.msra.mxu0 %v663
        %712 = vmatprep.mubr.bf16.mxu0 %v576
        %713 = vmatmul.mubr.bf16.gmra.mrb[0].mxu0 %v575
        %v714 = vpop.f32.mrb[0].mxu0
        %v715 = vadd.f32 %v582, %v714
        %v716 = vpop.f32.mrb[0].mxu0
        %v717 = vpop.f32.mrb[0].mxu0
        %v718 = vpop.f32.mrb[0].mxu0
        %719 = vdwg.mxu0
        %720 = vst [vmem:[%s322] sm:$0xff] %v715
        %s721 = sand.u32 %s185, 1
        %s722 = scalar_lea.sflag [#allocation4], %s721
        %s723 = sand.u32 %s185, 1
        %s724 = smul.addr %s723, 8
        %s725 = scalar_lea.vmem [#allocation8], %s724
        // Predicated region
        $region61: #{tpu_custom_call.1} parent=47 // pred_check
          %p726 = pneg %p195
        $region62: #{tpu_custom_call.1} parent=47 // pred_check_branch
          %728 = sbr.rel (%p726) target = $region64
        $region63: #{tpu_custom_call.1} parent=47 // pred_region
          %s730 = ssub.s32 128, 128
          %731 = vsyncadd %s722, %s730
          %s732 = smul.addr %s25, 128
          %s733 = scalar_lea.hbm %s7, %s732
          %s735 = sshll.u32 %s725, 4
          %s736 = int_to_ptr.vmem [resolvable:$true] %s735
          %738 = dma.vmem_to_hbm [thread:$0]  %s736, 128, %s733, %s722
        $region64: #{tpu_custom_call.1} parent=47 // pred_fallthru
          _
      $region48: #{tpu_custom_call.1} parent=5 // pred_fallthru
        _
      %p739 = scmp.le.s32.totalorder 2, %s20
      // Predicated region
      $region65: #{tpu_custom_call.1} parent=5 // pred_check
        %p740 = pneg %p739
      $region66: #{tpu_custom_call.1} parent=5 // pred_check_branch
        %742 = sbr.rel (%p740) target = $region68
      $region67: #{tpu_custom_call.1} parent=5 // pred_region
        %s743 = ssub.s32 %s20, 2
        // Predicated region
        $region69: #{tpu_custom_call.1} parent=67 // pred_check
          %p744 = pneg %p201
        $region70: #{tpu_custom_call.1} parent=67 // pred_check_branch
          %746 = sbr.rel (%p744) target = $region72
        $region71: #{tpu_custom_call.1} parent=67 // pred_region
          %s747 = sand.u32 %s186, 1
          %s748 = scalar_lea.sflag [#allocation4], %s747
          %s749 = sand.u32 %s186, 1
          %s750 = smul.addr %s749, 8
          %s751 = scalar_lea.vmem [#allocation8], %s750
          %752 = dma.done %s748, 128
        $region72: #{tpu_custom_call.1} parent=67 // pred_fallthru
          _
      $region68: #{tpu_custom_call.1} parent=5 // pred_fallthru
        _
    $region6: #{tpu_custom_call.1} parent=1 // loop_footer
      %s24 = sadd.s32 1, %s20
    $region7: #{tpu_custom_call.1} parent=1 // loop_footer_branch
      %19 = sbr.rel target = $region3
    $region8: #{tpu_custom_call.1} parent=1 // loop_exit
      _
    %753 = vsyncpa [#allocation3], 1
    %s754 = scalar_lea.sflag [#allocation3], 1
    %755 = vsyncpa %s754, 1
    %756 = vsyncpa [#allocation6], 1
    %757 = vsyncpa [#allocation4], 1
    %s758 = scalar_lea.sflag [#allocation4], 1
    %759 = vsyncpa %s758, 1

</llo_original>
